<compile_context>
chip_gen: v6e
topology: v6e:2x2x1
jax: 0.10.0
libtpu: 0.0.40
codegen_flags: <defaults>
</compile_context>

<pallas_src>
import functools

import jax
import jax.numpy as jnp
from jax.experimental import pallas as pl
from jax.experimental.pallas import tpu as pltpu

HIDDEN = 100
LANE = 128
HID_PAD = 128          # round_up(HIDDEN, LANE)
K_PACK = 16            # bf16 sublane packing for the first-matmul K dim
MAX_TB = 2048          # VMEM-safe batch-tile cap (<< default scoped VMEM)


def _round_up(n, m):
    return ((n + m - 1) // m) * m


def _device_kind():
    try:
        return jax.devices()[0].device_kind.lower()
    except Exception:
        return ""


_KIND = _device_kind()
# bf16 VALU exists on v6e/v7x; v5e and older lack it (keep f32 elementwise
# there).  Misdetection only affects perf/rounding, never correctness.
_HAS_BF16_VPU = not any(v in _KIND for v in ("v2", "v3", "v4", "v5"))
# v7x has 2 TensorCores per chip; the "parallel" grid axis shards across them.
_NUM_TC = 2 if ("v7" in _KIND or "7x" in _KIND) else 1


def mlp_kernel(x_ref, w1_ref, w2_ref, w3_ref, b_ref, o_ref, *, bf16_elementwise):
    """Fused 3-layer MLP on one (TB, .) batch tile.

    Weights (bf16, transposed to (in, out), zero-padded to 128-lane feature
    dims) stay VMEM-resident across grid steps via constant index_maps; the
    MXU accumulates in f32 (preferred_element_type).
    """
    b1 = b_ref[0:1, :HID_PAD]          # (1, 128) f32
    b2 = b_ref[1:2, :HID_PAD]          # (1, 128) f32
    b3 = b_ref[2:3, :]                 # (1, out_pad) f32

    x = x_ref[...].astype(jnp.bfloat16)                                   # (TB, K_pad)
    h1 = jnp.dot(x, w1_ref[...], preferred_element_type=jnp.float32)     # (TB, 128)
    if bf16_elementwise:   # v6e/v7x: bf16 VALU -> halve intermediate traffic
        h1 = jnp.maximum(h1.astype(jnp.bfloat16) + b1.astype(jnp.bfloat16), 0)
    else:                  # v5e: no bf16 VPU, stay in f32 then downcast once
        h1 = jnp.maximum(h1 + b1, 0.0).astype(jnp.bfloat16)

    h2 = jnp.dot(h1, w2_ref[...], preferred_element_type=jnp.float32)    # (TB, 128)
    if bf16_elementwise:
        h2 = jnp.maximum(h2.astype(jnp.bfloat16) + b2.astype(jnp.bfloat16), 0)
    else:
        h2 = jnp.maximum(h2 + b2, 0.0).astype(jnp.bfloat16)

    out = jnp.dot(h2, w3_ref[...], preferred_element_type=jnp.float32)   # (TB, out_pad)
    o_ref[...] = out + b3                                                 # f32 bias-add


@functools.partial(jax.jit, static_argnames=("out_dim", "padded_output"))
def network_forward(x, params, *, out_dim, padded_output=False):
    """x: (B, input_dimension) float32.  params: from init_params.

    Default returns (B, out_dim) float32 — identical semantics to
    Network.forward.  With padded_output=True the raw (B_pad, out_pad) slab is
    returned (padded action columns are exactly zero; rows beyond B are the
    network applied to a zero input) so consumers can avoid the extra slice.
    """
    w1, w2, w3, biases = params["w1"], params["w2"], params["w3"], params["biases"]
    B, in_dim = x.shape
    in_pad = w1.shape[0]
    out_pad = w3.shape[1]

    # --- batch tiling --------------------------------------------------------
    # This kernel is overhead-bound (~66 KFLOP/row), so minimize grid steps:
    # a single tile on 1-TC chips, two "parallel" tiles on dual-TC v7x so both
    # TensorCores get work.  TB capped so VMEM stays comfortably inside the
    # default scoped limit on every generation.
    B8 = _round_up(max(B, 1), 8)
    want_tiles = _NUM_TC if (_NUM_TC > 1 and B8 >= 512) else 1
    TB = min(_round_up(-(-B8 // want_tiles), 8), MAX_TB)
    B_pad = _round_up(B, TB)
    num_tiles = B_pad // TB

    pad_rows = B_pad - B
    pad_cols = in_pad - in_dim
    if pad_rows or pad_cols:
        x = jnp.pad(x, ((0, pad_rows), (0, pad_cols)))

    def const(shape):  # same block every grid step -> stays VMEM-resident
        return pl.BlockSpec(shape, lambda i: tuple(0 for _ in shape))

    out = pl.pallas_call(
        functools.partial(mlp_kernel, bf16_elementwise=_HAS_BF16_VPU),
        out_shape=jax.ShapeDtypeStruct((B_pad, out_pad), jnp.float32),
        grid=(num_tiles,),
        in_specs=[
            pl.BlockSpec((TB, in_pad), lambda i: (i, 0)),
            const(w1.shape), const(w2.shape), const(w3.shape), const(biases.shape),
        ],
        out_specs=pl.BlockSpec((TB, out_pad), lambda i: (i, 0)),
        compiler_params=pltpu.CompilerParams(
            dimension_semantics=("parallel",),
        ),
    )(x, w1, w2, w3, biases)

    if padded_output:
        return out
    if B_pad == B and out_pad == out_dim:
        return out
    return out[:B, :out_dim]


def init_params(key, input_dimension, output_dimension):
    """Deterministic init mirroring torch.nn.Linear defaults
    (W, b ~ U(-1/sqrt(fan_in), 1/sqrt(fan_in))), laid out for the kernel:
      * weights transposed to (in, out); first-layer K dim zero-padded to a
        multiple of 16 (clean bf16 sublane tile), feature dims zero-padded to
        multiples of 128 lanes; cast to bf16 (MXU operands);
      * the three biases stacked into one (3, out_pad) f32 array (single
        constant DMA stream, biases kept f32 for the final add).
    Zero padding keeps the math exact: padded K columns meet zero-padded x
    features, padded hidden units output ReLU(0)=0 and feed zero weight rows,
    padded output columns/biases are zero and are sliced off (or ignored)."""
    in_pad = _round_up(input_dimension, K_PACK)
    out_pad = _round_up(output_dimension, LANE)

    def linear(k, fan_in, fan_out, in_p, out_p):
        kw, kb = jax.random.split(k)
        bound = 1.0 / jnp.sqrt(jnp.float32(fan_in))
        w = jax.random.uniform(kw, (fan_in, fan_out), jnp.float32, -bound, bound)
        b = jax.random.uniform(kb, (fan_out,), jnp.float32, -bound, bound)
        w = jnp.pad(w, ((0, in_p - fan_in), (0, out_p - fan_out)))
        return w.astype(jnp.bfloat16), b

    k1, k2, k3 = jax.random.split(key, 3)
    w1, b1 = linear(k1, input_dimension, HIDDEN, in_pad, HID_PAD)
    w2, b2 = linear(k2, HIDDEN, HIDDEN, HID_PAD, HID_PAD)
    w3, b3 = linear(k3, HIDDEN, output_dimension, HID_PAD, out_pad)

    biases = jnp.zeros((3, out_pad), jnp.float32)        # out_pad >= HID_PAD
    biases = biases.at[0, :HIDDEN].set(b1)
    biases = biases.at[1, :HIDDEN].set(b2)
    biases = biases.at[2, :output_dimension].set(b3)
    return {"w1": w1, "w2": w2, "w3": w3, "biases": biases}


def reference_forward(x, p, out_dim):
    """Pure-JAX f32 reference on the same (padded) parameters."""
    w1 = p["w1"].astype(jnp.float32)[: x.shape[1], :]
    w2 = p["w2"].astype(jnp.float32)
    w3 = p["w3"].astype(jnp.float32)
    b = p["biases"]
    h1 = jax.nn.relu(x @ w1 + b[0:1, : w1.shape[1]])
    h2 = jax.nn.relu(h1 @ w2 + b[1:2, : w2.shape[1]])
    return (h2 @ w3 + b[2:3, :])[:, :out_dim]


if __name__ == "__main__":
    key = jax.random.PRNGKey(0)
    kx, kx_big, kp = jax.random.split(key, 3)

    input_dimension = 4   # small state vector
    output_dimension = 2  # number of actions
    params = init_params(kp, input_dimension, output_dimension)

    # Small shape matching the module spec (batch=2): single grid step.
    x_small = jax.random.normal(kx, (2, input_dimension), jnp.float32)
    out_small = jax.block_until_ready(
        network_forward(x_small, params, out_dim=output_dimension))
    ref_small = reference_forward(x_small, params, output_dimension)
    assert out_small.shape == (2, output_dimension)
    # bf16 MXU operands with f32 accumulation -> loosened tolerance vs f32 ref.
    assert jnp.allclose(out_small, ref_small, atol=3e-2, rtol=3e-2)

    # Replay-sized batch (> MAX_TB): exercises the multi-tile "parallel" batch
    # grid plus batch-row padding, with VMEM-resident weights.
    x_big = jax.random.normal(kx_big, (3000, input_dimension), jnp.float32)
    out_big = jax.block_until_ready(
        network_forward(x_big, params, out_dim=output_dimension))
    ref_big = reference_forward(x_big, params, output_dimension)
    assert out_big.shape == (3000, output_dimension)
    assert jnp.allclose(out_big, ref_big, atol=3e-2, rtol=3e-2)

    print("KERNEL_OK")
</pallas_src>

<mosaic_0001>
module attributes {stable_mosaic.version = 11 : i64} {
  func.func @mlp_kernel(%arg0: i32, %arg1: memref<8x16xf32, #tpu.memory_space<vmem>>, %arg2: memref<16x128xbf16, #tpu.memory_space<vmem>>, %arg3: memref<128x128xbf16, #tpu.memory_space<vmem>>, %arg4: memref<128x128xbf16, #tpu.memory_space<vmem>>, %arg5: memref<3x128xf32, #tpu.memory_space<vmem>>, %arg6: memref<8x128xf32, #tpu.memory_space<vmem>>) attributes {dimension_semantics = [#tpu.dimension_semantics<parallel>], iteration_bounds = array<i64: 1>, scalar_prefetch = 0 : i64, scratch_operands = 0 : i64, tpu.core_type = #tpu.core_type<tc>, window_params = [{transform_indices = @transform_0, window_bounds = array<i64: 8, 16>}, {pipeline_mode = #tpu.pipeline_mode<synchronous>, transform_indices = @transform_1, window_bounds = array<i64: 16, 128>}, {pipeline_mode = #tpu.pipeline_mode<synchronous>, transform_indices = @transform_2, window_bounds = array<i64: 128, 128>}, {pipeline_mode = #tpu.pipeline_mode<synchronous>, transform_indices = @transform_3, window_bounds = array<i64: 128, 128>}, {pipeline_mode = #tpu.pipeline_mode<synchronous>, transform_indices = @transform_4, window_bounds = array<i64: 3, 128>}, {transform_indices = @transform_5, window_bounds = array<i64: 8, 128>}]} {
    %c0 = arith.constant 0 : index
    %c0_0 = arith.constant 0 : index
    %0 = vector.load %arg5[%c0, %c0_0] : memref<3x128xf32, #tpu.memory_space<vmem>>, vector<1x128xf32>
    %c1 = arith.constant 1 : index
    %c0_1 = arith.constant 0 : index
    %1 = vector.load %arg5[%c1, %c0_1] : memref<3x128xf32, #tpu.memory_space<vmem>>, vector<1x128xf32>
    %c2 = arith.constant 2 : index
    %c0_2 = arith.constant 0 : index
    %2 = vector.load %arg5[%c2, %c0_2] : memref<3x128xf32, #tpu.memory_space<vmem>>, vector<1x128xf32>
    %c0_3 = arith.constant 0 : index
    %c0_4 = arith.constant 0 : index
    %3 = vector.load %arg1[%c0_3, %c0_4] : memref<8x16xf32, #tpu.memory_space<vmem>>, vector<8x16xf32>
    %4 = arith.truncf %3 : vector<8x16xf32> to vector<8x16xbf16>
    %c0_5 = arith.constant 0 : index
    %c0_6 = arith.constant 0 : index
    %5 = vector.load %arg2[%c0_5, %c0_6] : memref<16x128xbf16, #tpu.memory_space<vmem>>, vector<16x128xbf16>
    %cst = arith.constant dense<0.000000e+00> : vector<8x128xf32>
    %6 = tpu.matmul %4, %5, %cst {dimension_numbers = #tpu.dot_dimension_numbers<[1], [0], [0], [1], [0, 0, 1, 1], [], []>} : vector<8x16xbf16>, vector<16x128xbf16>, vector<8x128xf32> -> vector<8x128xf32>
    %7 = arith.truncf %6 : vector<8x128xf32> to vector<8x128xbf16>
    %8 = arith.truncf %0 : vector<1x128xf32> to vector<1x128xbf16>
    %9 = vector.broadcast %8 : vector<1x128xbf16> to vector<8x128xbf16>
    %10 = arith.addf %7, %9 : vector<8x128xbf16>
    %cst_7 = arith.constant 0.000000e+00 : bf16
    %11 = vector.broadcast %cst_7 : bf16 to vector<8x128xbf16>
    %12 = arith.maximumf %10, %11 : vector<8x128xbf16>
    %c0_8 = arith.constant 0 : index
    %c0_9 = arith.constant 0 : index
    %13 = vector.load %arg3[%c0_8, %c0_9] : memref<128x128xbf16, #tpu.memory_space<vmem>>, vector<128x128xbf16>
    %cst_10 = arith.constant dense<0.000000e+00> : vector<8x128xf32>
    %14 = tpu.matmul %12, %13, %cst_10 {dimension_numbers = #tpu.dot_dimension_numbers<[1], [0], [0], [1], [0, 0, 1, 1], [], []>} : vector<8x128xbf16>, vector<128x128xbf16>, vector<8x128xf32> -> vector<8x128xf32>
    %15 = arith.truncf %14 : vector<8x128xf32> to vector<8x128xbf16>
    %16 = arith.truncf %1 : vector<1x128xf32> to vector<1x128xbf16>
    %17 = vector.broadcast %16 : vector<1x128xbf16> to vector<8x128xbf16>
    %18 = arith.addf %15, %17 : vector<8x128xbf16>
    %cst_11 = arith.constant 0.000000e+00 : bf16
    %19 = vector.broadcast %cst_11 : bf16 to vector<8x128xbf16>
    %20 = arith.maximumf %18, %19 : vector<8x128xbf16>
    %c0_12 = arith.constant 0 : index
    %c0_13 = arith.constant 0 : index
    %21 = vector.load %arg4[%c0_12, %c0_13] : memref<128x128xbf16, #tpu.memory_space<vmem>>, vector<128x128xbf16>
    %cst_14 = arith.constant dense<0.000000e+00> : vector<8x128xf32>
    %22 = tpu.matmul %20, %21, %cst_14 {dimension_numbers = #tpu.dot_dimension_numbers<[1], [0], [0], [1], [0, 0, 1, 1], [], []>} : vector<8x128xbf16>, vector<128x128xbf16>, vector<8x128xf32> -> vector<8x128xf32>
    %23 = vector.broadcast %2 : vector<1x128xf32> to vector<8x128xf32>
    %24 = arith.addf %22, %23 : vector<8x128xf32>
    %c0_15 = arith.constant 0 : index
    %c0_16 = arith.constant 0 : index
    %25 = vector.load %arg6[%c0_15, %c0_16] : memref<8x128xf32, #tpu.memory_space<vmem>>, vector<8x128xf32>
    tpu.vector_store %arg6[%c0_15, %c0_16], %24 {strides = array<i32>} : memref<8x128xf32, #tpu.memory_space<vmem>>, vector<8x128xf32>,
    return
  }
  func.func @transform_0(%arg0: i32) -> (i32, i32) {
    %c0_i32 = arith.constant 0 : i32
    %c0_i32_0 = arith.constant 0 : i32
    return %arg0, %c0_i32 : i32, i32
  }
  func.func @transform_1(%arg0: i32) -> (i32, i32) {
    %c0_i32 = arith.constant 0 : i32
    %c0_i32_0 = arith.constant 0 : i32
    %c0_i32_1 = arith.constant 0 : i32
    return %c0_i32, %c0_i32_0 : i32, i32
  }
  func.func @transform_2(%arg0: i32) -> (i32, i32) {
    %c0_i32 = arith.constant 0 : i32
    %c0_i32_0 = arith.constant 0 : i32
    %c0_i32_1 = arith.constant 0 : i32
    return %c0_i32, %c0_i32_0 : i32, i32
  }
  func.func @transform_3(%arg0: i32) -> (i32, i32) {
    %c0_i32 = arith.constant 0 : i32
    %c0_i32_0 = arith.constant 0 : i32
    %c0_i32_1 = arith.constant 0 : i32
    return %c0_i32, %c0_i32_0 : i32, i32
  }
  func.func @transform_4(%arg0: i32) -> (i32, i32) {
    %c0_i32 = arith.constant 0 : i32
    %c0_i32_0 = arith.constant 0 : i32
    %c0_i32_1 = arith.constant 0 : i32
    return %c0_i32, %c0_i32_0 : i32, i32
  }
  func.func @transform_5(%arg0: i32) -> (i32, i32) {
    %c0_i32 = arith.constant 0 : i32
    %c0_i32_0 = arith.constant 0 : i32
    return %arg0, %c0_i32 : i32, i32
  }
}

</mosaic_0001>

<llo_original>
// kernel: network_forward.1
$region0: #{network_forward.1}
  #allocation0 [shape = 'u32[]', space=smem, size = 0x4, offset = 0x4, fixed_abs, tag = 'smem constant byte address 0x4 - core index']
  #allocation1 [shape = 'u32[144,128]{1,0:T(1,128)}', space=vmem, size = 0x12000, scoped, tag = 'internal scratch']
  %s0 = inlined_call_operand.vmem [shape: f32[8,16], index: 0, kind: input, shape index: {}]
  %s1 = inlined_call_operand.vmem [shape: bf16[16,128], index: 1, kind: input, shape index: {}]
  %s2 = inlined_call_operand.hbm [shape: bf16[128,128], index: 2, kind: input, shape index: {}]
  %s3 = inlined_call_operand.hbm [shape: bf16[128,128], index: 3, kind: input, shape index: {}]
  %s4 = inlined_call_operand.vmem [shape: f32[3,128], index: 4, kind: input, shape index: {}]
  %s5 = inlined_call_operand.vmem [shape: f32[8,128], index: 5, kind: output, shape index: {}]
  %s6 = sld [smem:[#allocation0]]
  $region38: #{network_forward.1} parent=0
    _
  %s8 = ssub.s32 1, %s6
  %s9 = scalar_select 0, %s8, %s6
  $region1: #{network_forward.1} parent=0
    #allocation2 [shape = 'u8[32768]{0}', space=vmem, size = 0x8000, scoped, tag = 'input window, operand 2, single buffered']
    #allocation3 [shape = 's32[1]{0}', space=sflag, size = 0x4, scoped, tag = 'scoped memory for network_forward.1']
    #allocation4 [shape = 'u8[32768]{0}', space=vmem, size = 0x8000, scoped, tag = 'input window, operand 3, single buffered']
    #allocation5 [shape = 's32[1]{0}', space=sflag, size = 0x4, scoped, tag = 'scoped memory for network_forward.1']
    %10 = vsyncpa [#allocation3], 0
    %11 = vsyncpa [#allocation5], 0
    // Predicated region
    $region2: #{network_forward.1} parent=1 // pred_check
      _
    $region3: #{network_forward.1} parent=1 // pred_check_branch
      %13 = sbr.rel (0) target = $region5
    $region4: #{network_forward.1} parent=1 // pred_region
      _
    $region5: #{network_forward.1} parent=1 // pred_fallthru
      _
    // Predicated region
    $region6: #{network_forward.1} parent=1 // pred_check
      _
    $region7: #{network_forward.1} parent=1 // pred_check_branch
      %15 = sbr.rel (0) target = $region9
    $region8: #{network_forward.1} parent=1 // pred_region
      _
    $region9: #{network_forward.1} parent=1 // pred_fallthru
      _
    // Predicated region
    $region10: #{network_forward.1} parent=1 // pred_check
      _
    $region11: #{network_forward.1} parent=1 // pred_check_branch
      %17 = sbr.rel (0) target = $region13
    $region12: #{network_forward.1} parent=1 // pred_region
      %s19 = ssub.s32 1024, 1024
      %20 = vsyncadd [#allocation3], %s19
      %s21 = sshll.u32 [#allocation2], 4
      %s22 = int_to_ptr.vmem [resolvable:$true] %s21
      %27 = dma.hbm_to_vmem [thread:$0]  %s2, 1024, %s22, [#allocation3], 64, 64, 4
    $region13: #{network_forward.1} parent=1 // pred_fallthru
      _
    // Predicated region
    $region14: #{network_forward.1} parent=1 // pred_check
      _
    $region15: #{network_forward.1} parent=1 // pred_check_branch
      %29 = sbr.rel (0) target = $region17
    $region16: #{network_forward.1} parent=1 // pred_region
      %s31 = ssub.s32 1024, 1024
      %32 = vsyncadd [#allocation5], %s31
      %s33 = sshll.u32 [#allocation4], 4
      %s34 = int_to_ptr.vmem [resolvable:$true] %s33
      %39 = dma.hbm_to_vmem [thread:$0]  %s3, 1024, %s34, [#allocation5], 64, 64, 4
    $region17: #{network_forward.1} parent=1 // pred_fallthru
      _
    // Predicated region
    $region18: #{network_forward.1} parent=1 // pred_check
      _
    $region19: #{network_forward.1} parent=1 // pred_check_branch
      %41 = sbr.rel (0) target = $region21
    $region20: #{network_forward.1} parent=1 // pred_region
      _
    $region21: #{network_forward.1} parent=1 // pred_fallthru
      _
    // Predicated region
    $region22: #{network_forward.1} parent=1 // pred_check
      _
    $region23: #{network_forward.1} parent=1 // pred_check_branch
      %43 = sbr.rel (0) target = $region25
    $region24: #{network_forward.1} parent=1 // pred_region
      %44 = dma.done [#allocation3], 1024
    $region25: #{network_forward.1} parent=1 // pred_fallthru
      _
    // Predicated region
    $region26: #{network_forward.1} parent=1 // pred_check
      _
    $region27: #{network_forward.1} parent=1 // pred_check_branch
      %46 = sbr.rel (0) target = $region29
    $region28: #{network_forward.1} parent=1 // pred_region
      %47 = dma.done [#allocation5], 1024
    $region29: #{network_forward.1} parent=1 // pred_fallthru
      _
    %v49 = vld [vmem:[%s4] sm:$0x1]
    %v50 = vld [vmem:[%s4 + $0x1] sm:$0x1]
    %v51 = vld [vmem:[%s4 + $0x2] sm:$0x1]
    %v52 = vld [vmem:[%s0] sm:$0xff]
    %v53 = vpack.c.bf16 %v52, %v52
    %v54 = vld [vmem:[%s1] sm:$0xf]
    %v55 = vld [vmem:[%s1 + $0x4] sm:$0xf]
    %v58 = vunpack.c.l.b16 %v54
    %v59 = vunpack.c.l.b16 %v55
    %v60 = vpack.c.b16 %v59, %v58
    %vm62 = vcmask 130048
    %v64 = vsel %vm62, %v53, 0
    %66 = vmatprep.subr.bf16.mxu0 0
    %67 = vmatpush1.bf16.msra.mxu0 0
    %68 = vmatprep.subr.bf16.mxu0 0
    %69 = vmatpush1.bf16.msra.mxu0 0
    %70 = vmatprep.subr.bf16.mxu0 0
    %71 = vmatpush1.bf16.msra.mxu0 0
    %72 = vmatprep.subr.bf16.mxu0 0
    %73 = vmatpush1.bf16.msra.mxu0 0
    %74 = vmatprep.subr.bf16.mxu0 0
    %75 = vmatpush1.bf16.msra.mxu0 0
    %76 = vmatprep.subr.bf16.mxu0 0
    %77 = vmatpush1.bf16.msra.mxu0 0
    %78 = vmatprep.subr.bf16.mxu0 0
    %79 = vmatpush1.bf16.msra.mxu0 0
    %80 = vmatprep.subr.bf16.mxu0 0
    %81 = vmatpush1.bf16.msra.mxu0 %v60
    %82 = vmatprep.subr.bf16.mxu0 0
    %83 = vmatpush2.bf16.msra.mxu0 0
    %84 = vmatprep.subr.bf16.mxu0 0
    %85 = vmatpush2.bf16.msra.mxu0 0
    %86 = vmatprep.subr.bf16.mxu0 0
    %87 = vmatpush2.bf16.msra.mxu0 0
    %88 = vmatprep.subr.bf16.mxu0 0
    %89 = vmatpush2.bf16.msra.mxu0 0
    %90 = vmatprep.subr.bf16.mxu0 0
    %91 = vmatpush2.bf16.msra.mxu0 0
    %92 = vmatprep.subr.bf16.mxu0 0
    %93 = vmatpush2.bf16.msra.mxu0 0
    %94 = vmatprep.subr.bf16.mxu0 0
    %95 = vmatpush2.bf16.msra.mxu0 0
    %96 = vmatprep.subr.bf16.mxu0 0
    %97 = vmatpush2.bf16.msra.mxu0 0
    %98 = vmatprep.mubr.bf16.mxu0 0
    %99 = vmatmul.mubr.bf16.gmra.mxu0 %v64
    %v100 = vpop.f32.mrf.mxu0
    %v101 = vadd.f32 0.0, %v100
    %v102 = vpop.f32.mrf.mxu0
    %v103 = vpop.f32.mrf.mxu0
    %v104 = vpop.f32.mrf.mxu0
    %105 = vdwg.mxu0
    %v106 = vpack.c.bf16 %v101, %v101
    %v107 = vpack.c.bf16 %v49, %v49
    %v109 = vpack.i.b16 %v107, %v107
    %v111 = vlaneseq
    %v112 = vshrl.u32 %v111, 7
    %v113 = vsub.s32 0, %v112
    %v114 = vrot.slane %v109, %v113
    %v115 = vadd.bf16 %v106, %v114
    %v116 = vmax.bf16 %v115, 0
    %v117 = vld [vmem:[#allocation2] sm:$0xf]
    %v118 = vld [vmem:[#allocation2 + $0x4] sm:$0xf]
    %v119 = vld [vmem:[#allocation2 + $0x8] sm:$0xf]
    %v120 = vld [vmem:[#allocation2 + $0xc] sm:$0xf]
    %v121 = vld [vmem:[#allocation2 + $0x10] sm:$0xf]
    %v122 = vld [vmem:[#allocation2 + $0x14] sm:$0xf]
    %v123 = vld [vmem:[#allocation2 + $0x18] sm:$0xf]
    %v124 = vld [vmem:[#allocation2 + $0x1c] sm:$0xf]
    %v125 = vld [vmem:[#allocation2 + $0x20] sm:$0xf]
    %v126 = vld [vmem:[#allocation2 + $0x24] sm:$0xf]
    %v127 = vld [vmem:[#allocation2 + $0x28] sm:$0xf]
    %v128 = vld [vmem:[#allocation2 + $0x2c] sm:$0xf]
    %v129 = vld [vmem:[#allocation2 + $0x30] sm:$0xf]
    %v130 = vld [vmem:[#allocation2 + $0x34] sm:$0xf]
    %v131 = vld [vmem:[#allocation2 + $0x38] sm:$0xf]
    %v132 = vld [vmem:[#allocation2 + $0x3c] sm:$0xf]
    %v149 = vunpack.c.l.b16 %v117
    %v150 = vunpack.c.l.b16 %v118
    %v151 = vunpack.c.l.b16 %v119
    %v152 = vunpack.c.l.b16 %v120
    %v153 = vunpack.c.l.b16 %v121
    %v154 = vunpack.c.l.b16 %v122
    %v155 = vunpack.c.l.b16 %v123
    %v156 = vunpack.c.l.b16 %v124
    %v157 = vunpack.c.l.b16 %v125
    %v158 = vunpack.c.l.b16 %v126
    %v159 = vunpack.c.l.b16 %v127
    %v160 = vunpack.c.l.b16 %v128
    %v161 = vunpack.c.l.b16 %v129
    %v162 = vunpack.c.l.b16 %v130
    %v163 = vunpack.c.l.b16 %v131
    %v164 = vunpack.c.l.b16 %v132
    %v165 = vpack.c.b16 %v150, %v149
    %v166 = vpack.c.b16 %v152, %v151
    %v167 = vpack.c.b16 %v154, %v153
    %v168 = vpack.c.b16 %v156, %v155
    %v169 = vpack.c.b16 %v158, %v157
    %v170 = vpack.c.b16 %v160, %v159
    %v171 = vpack.c.b16 %v162, %v161
    %v172 = vpack.c.b16 %v164, %v163
    %181 = vmatprep.subr.bf16.mxu0 0
    %182 = vmatpush1.bf16.msra.mxu0 %v172
    %183 = vmatprep.subr.bf16.mxu0 0
    %184 = vmatpush1.bf16.msra.mxu0 %v171
    %185 = vmatprep.subr.bf16.mxu0 0
    %186 = vmatpush1.bf16.msra.mxu0 %v170
    %187 = vmatprep.subr.bf16.mxu0 0
    %188 = vmatpush1.bf16.msra.mxu0 %v169
    %189 = vmatprep.subr.bf16.mxu0 0
    %190 = vmatpush1.bf16.msra.mxu0 %v168
    %191 = vmatprep.subr.bf16.mxu0 0
    %192 = vmatpush1.bf16.msra.mxu0 %v167
    %193 = vmatprep.subr.bf16.mxu0 0
    %194 = vmatpush1.bf16.msra.mxu0 %v166
    %195 = vmatprep.subr.bf16.mxu0 0
    %196 = vmatpush1.bf16.msra.mxu0 %v165
    %197 = vmatprep.subr.bf16.mxu0 0
    %198 = vmatpush2.bf16.msra.mxu0 0
    %199 = vmatprep.subr.bf16.mxu0 0
    %200 = vmatpush2.bf16.msra.mxu0 0
    %201 = vmatprep.subr.bf16.mxu0 0
    %202 = vmatpush2.bf16.msra.mxu0 0
    %203 = vmatprep.subr.bf16.mxu0 0
    %204 = vmatpush2.bf16.msra.mxu0 0
    %205 = vmatprep.subr.bf16.mxu0 0
    %206 = vmatpush2.bf16.msra.mxu0 0
    %207 = vmatprep.subr.bf16.mxu0 0
    %208 = vmatpush2.bf16.msra.mxu0 0
    %209 = vmatprep.subr.bf16.mxu0 0
    %210 = vmatpush2.bf16.msra.mxu0 0
    %211 = vmatprep.subr.bf16.mxu0 0
    %212 = vmatpush2.bf16.msra.mxu0 0
    %213 = vmatprep.mubr.bf16.mxu0 0
    %214 = vmatmul.mubr.bf16.gmra.mxu0 %v116
    %v215 = vpop.f32.mrf.mxu0
    %v216 = vadd.f32 0.0, %v215
    %v217 = vpop.f32.mrf.mxu0
    %v218 = vpop.f32.mrf.mxu0
    %v219 = vpop.f32.mrf.mxu0
    %220 = vdwg.mxu0
    %v221 = vpack.c.bf16 %v216, %v216
    %v222 = vpack.c.bf16 %v50, %v50
    %v224 = vpack.i.b16 %v222, %v222
    %v226 = vlaneseq
    %v227 = vshrl.u32 %v226, 7
    %v228 = vsub.s32 0, %v227
    %v229 = vrot.slane %v224, %v228
    %v230 = vadd.bf16 %v221, %v229
    %v231 = vmax.bf16 %v230, 0
    %v232 = vld [vmem:[#allocation4] sm:$0xf]
    %v233 = vld [vmem:[#allocation4 + $0x4] sm:$0xf]
    %v234 = vld [vmem:[#allocation4 + $0x8] sm:$0xf]
    %v235 = vld [vmem:[#allocation4 + $0xc] sm:$0xf]
    %v236 = vld [vmem:[#allocation4 + $0x10] sm:$0xf]
    %v237 = vld [vmem:[#allocation4 + $0x14] sm:$0xf]
    %v238 = vld [vmem:[#allocation4 + $0x18] sm:$0xf]
    %v239 = vld [vmem:[#allocation4 + $0x1c] sm:$0xf]
    %v240 = vld [vmem:[#allocation4 + $0x20] sm:$0xf]
    %v241 = vld [vmem:[#allocation4 + $0x24] sm:$0xf]
    %v242 = vld [vmem:[#allocation4 + $0x28] sm:$0xf]
    %v243 = vld [vmem:[#allocation4 + $0x2c] sm:$0xf]
    %v244 = vld [vmem:[#allocation4 + $0x30] sm:$0xf]
    %v245 = vld [vmem:[#allocation4 + $0x34] sm:$0xf]
    %v246 = vld [vmem:[#allocation4 + $0x38] sm:$0xf]
    %v247 = vld [vmem:[#allocation4 + $0x3c] sm:$0xf]
    %v248 = vlaneseq
    %v249 = vshrl.u32 %v248, 7
    %v250 = vsub.s32 0, %v249
    %v251 = vrot.slane %v51, %v250
    %v268 = vunpack.c.l.b16 %v232
    %v269 = vunpack.c.l.b16 %v233
    %v270 = vunpack.c.l.b16 %v234
    %v271 = vunpack.c.l.b16 %v235
    %v272 = vunpack.c.l.b16 %v236
    %v273 = vunpack.c.l.b16 %v237
    %v274 = vunpack.c.l.b16 %v238
    %v275 = vunpack.c.l.b16 %v239
    %v276 = vunpack.c.l.b16 %v240
    %v277 = vunpack.c.l.b16 %v241
    %v278 = vunpack.c.l.b16 %v242
    %v279 = vunpack.c.l.b16 %v243
    %v280 = vunpack.c.l.b16 %v244
    %v281 = vunpack.c.l.b16 %v245
    %v282 = vunpack.c.l.b16 %v246
    %v283 = vunpack.c.l.b16 %v247
    %v284 = vpack.c.b16 %v269, %v268
    %v285 = vpack.c.b16 %v271, %v270
    %v286 = vpack.c.b16 %v273, %v272
    %v287 = vpack.c.b16 %v275, %v274
    %v288 = vpack.c.b16 %v277, %v276
    %v289 = vpack.c.b16 %v279, %v278
    %v290 = vpack.c.b16 %v281, %v280
    %v291 = vpack.c.b16 %v283, %v282
    %300 = vmatprep.subr.bf16.mxu0 0
    %301 = vmatpush1.bf16.msra.mxu0 %v291
    %302 = vmatprep.subr.bf16.mxu0 0
    %303 = vmatpush1.bf16.msra.mxu0 %v290
    %304 = vmatprep.subr.bf16.mxu0 0
    %305 = vmatpush1.bf16.msra.mxu0 %v289
    %306 = vmatprep.subr.bf16.mxu0 0
    %307 = vmatpush1.bf16.msra.mxu0 %v288
    %308 = vmatprep.subr.bf16.mxu0 0
    %309 = vmatpush1.bf16.msra.mxu0 %v287
    %310 = vmatprep.subr.bf16.mxu0 0
    %311 = vmatpush1.bf16.msra.mxu0 %v286
    %312 = vmatprep.subr.bf16.mxu0 0
    %313 = vmatpush1.bf16.msra.mxu0 %v285
    %314 = vmatprep.subr.bf16.mxu0 0
    %315 = vmatpush1.bf16.msra.mxu0 %v284
    %316 = vmatprep.subr.bf16.mxu0 0
    %317 = vmatpush2.bf16.msra.mxu0 0
    %318 = vmatprep.subr.bf16.mxu0 0
    %319 = vmatpush2.bf16.msra.mxu0 0
    %320 = vmatprep.subr.bf16.mxu0 0
    %321 = vmatpush2.bf16.msra.mxu0 0
    %322 = vmatprep.subr.bf16.mxu0 0
    %323 = vmatpush2.bf16.msra.mxu0 0
    %324 = vmatprep.subr.bf16.mxu0 0
    %325 = vmatpush2.bf16.msra.mxu0 0
    %326 = vmatprep.subr.bf16.mxu0 0
    %327 = vmatpush2.bf16.msra.mxu0 0
    %328 = vmatprep.subr.bf16.mxu0 0
    %329 = vmatpush2.bf16.msra.mxu0 0
    %330 = vmatprep.subr.bf16.mxu0 0
    %331 = vmatpush2.bf16.msra.mxu0 0
    %332 = vmatprep.mubr.bf16.mxu0 0
    %333 = vmatmul.mubr.bf16.gmra.mxu0 %v231
    %v334 = vpop.f32.mrf.mxu0
    %v335 = vadd.f32 %v251, %v334
    %v336 = vpop.f32.mrf.mxu0
    %v337 = vpop.f32.mrf.mxu0
    %v338 = vpop.f32.mrf.mxu0
    %339 = vdwg.mxu0
    %340 = vst [vmem:[%s5] sm:$0xff] %v335
    // Predicated region
    $region30: #{network_forward.1} parent=1 // pred_check
      _
    $region31: #{network_forward.1} parent=1 // pred_check_branch
      %342 = sbr.rel (0) target = $region33
    $region32: #{network_forward.1} parent=1 // pred_region
      _
    $region33: #{network_forward.1} parent=1 // pred_fallthru
      _
    // Predicated region
    $region34: #{network_forward.1} parent=1 // pred_check
      _
    $region35: #{network_forward.1} parent=1 // pred_check_branch
      %344 = sbr.rel (0) target = $region37
    $region36: #{network_forward.1} parent=1 // pred_region
      _
    $region37: #{network_forward.1} parent=1 // pred_fallthru
      _
    %345 = vsyncpa [#allocation3], 1
    %346 = vsyncpa [#allocation5], 1

</llo_original>
